<compile_context>
chip_gen: v7x
topology: tpu7x:2x2x1
jax: 0.10.0
libtpu: 0.0.40
codegen_flags: <defaults>
</compile_context>

<pallas_src>
import functools

import jax
import jax.numpy as jnp
from jax.experimental import pallas as pl
from jax.experimental.pallas import tpu as pltpu

_LANE = 128        # lane width of a vreg
_SUBLANE = 8       # sublanes of a vreg
_TILE_ROWS = 2048  # rows of 128 lanes per grid step (~1 MiB f32 per operand block)


def _haversine_kernel(xlat_ref, xlon_ref, ylat_ref, ylon_ref, o_ref):
    # All refs are (tile_rows, 128) VMEM tiles -> full (8,128) vregs, lane-dense.
    xlat = xlat_ref[...].astype(jnp.float32)
    xlon = xlon_ref[...].astype(jnp.float32)
    ylat = ylat_ref[...].astype(jnp.float32)
    ylon = ylon_ref[...].astype(jnp.float32)

    dlat = xlat - ylat
    dlon = xlon - ylon
    slat = xlat + ylat

    cos_dlat = jnp.cos(dlat)
    cos_dlon = jnp.cos(dlon)
    cos_slat = jnp.cos(slat)

    # sin^2(dlat/2) = (1 - cos(dlat)) / 2
    lhs = 0.5 * (1.0 - cos_dlat)
    # cos(xlat) * cos(ylat) = (cos(dlat) + cos(slat)) / 2   (shares cos_dlat)
    cc = 0.5 * (cos_dlat + cos_slat)
    rhs = cc * (0.5 * (1.0 - cos_dlon))

    # Clamp: a can drift a few ULPs outside [0,1] -> sqrt(1-a) would NaN.
    a = jnp.clip(lhs + rhs, 0.0, 1.0)
    o_ref[...] = jnp.arctan2(jnp.sqrt(a), jnp.sqrt(1.0 - a)).astype(o_ref.dtype)


@functools.partial(jax.jit, static_argnames=("tile_rows",))
def haversine_loss(x, y, *, tile_rows=_TILE_ROWS):
    """x, y: (B, 2) arrays (lat, lon in radians) -> (B,) haversine 'loss'."""
    assert x.shape == y.shape and x.ndim == 2 and x.shape[1] == 2
    B = x.shape[0]
    out_dtype = x.dtype

    # Round the batch up so it reshapes into (rows, 128) planes with `rows`
    # a multiple of both the sublane count and the tile height -> clean
    # (8,128) tiling and full-sized blocks on every grid step.
    rows = -(-B // _LANE)                      # ceil(B / 128)
    rows = -(-rows // _SUBLANE) * _SUBLANE     # round up to multiple of 8
    tr = min(tile_rows, rows)
    rows = -(-rows // tr) * tr                 # round up to multiple of tile
    Bp = rows * _LANE
    grid = (rows // tr,)

    def _split(t):
        lat = t[:, 0]
        lon = t[:, 1]
        if Bp != B:
            lat = jnp.pad(lat, (0, Bp - B))
            lon = jnp.pad(lon, (0, Bp - B))
        return lat.reshape(rows, _LANE), lon.reshape(rows, _LANE)

    x_lat, x_lon = _split(x)
    y_lat, y_lon = _split(y)

    spec = pl.BlockSpec((tr, _LANE), lambda i: (i, 0))

    out = pl.pallas_call(
        _haversine_kernel,
        out_shape=jax.ShapeDtypeStruct((rows, _LANE), out_dtype),
        grid=grid,
        in_specs=[spec, spec, spec, spec],
        out_specs=spec,
        compiler_params=pltpu.CompilerParams(
            dimension_semantics=("parallel",),  # megacore sharding on v7x
        ),
        cost_estimate=pl.CostEstimate(
            flops=18 * Bp,
            transcendentals=4 * Bp,          # 3 cos + 1 atan2 per element
            bytes_accessed=5 * 4 * Bp,       # 4 input planes + 1 output, f32
        ),
    )(x_lat, x_lon, y_lat, y_lon)

    return out.reshape(Bp)[:B]


def _haversine_ref(x, y):
    lhs = jnp.sin((x[:, 0] - y[:, 0]) / 2) ** 2
    rhs = jnp.cos(x[:, 0]) * jnp.cos(y[:, 0]) * jnp.sin((x[:, 1] - y[:, 1]) / 2) ** 2
    a = lhs + rhs
    return jnp.arctan2(jnp.sqrt(a), jnp.sqrt(1 - a))


if __name__ == "__main__":
    key = jax.random.PRNGKey(0)
    kx, ky = jax.random.split(key)
    kx1, kx2 = jax.random.split(kx)
    ky1, ky2 = jax.random.split(ky)
    B = 8
    # lat in [-pi/2, pi/2], lon in [-pi, pi] (radians)
    x = jnp.stack(
        [
            jax.random.uniform(kx1, (B,), jnp.float32, -jnp.pi / 2, jnp.pi / 2),
            jax.random.uniform(kx2, (B,), jnp.float32, -jnp.pi, jnp.pi),
        ],
        axis=1,
    )
    y = jnp.stack(
        [
            jax.random.uniform(ky1, (B,), jnp.float32, -jnp.pi / 2, jnp.pi / 2),
            jax.random.uniform(ky2, (B,), jnp.float32, -jnp.pi, jnp.pi),
        ],
        axis=1,
    )

    out = haversine_loss(x, y)
    jax.block_until_ready(out)

    ref = _haversine_ref(x, y)
    assert out.shape == (B,), out.shape
    assert jnp.allclose(out, ref, atol=1e-4, rtol=1e-5), (out, ref)
    print("KERNEL_OK")
</pallas_src>

<mosaic_0001>
module attributes {stable_mosaic.version = 11 : i64} {
  func.func @_haversine_kernel(%arg0: i32, %arg1: memref<8x128xf32, #tpu.memory_space<vmem>>, %arg2: memref<8x128xf32, #tpu.memory_space<vmem>>, %arg3: memref<8x128xf32, #tpu.memory_space<vmem>>, %arg4: memref<8x128xf32, #tpu.memory_space<vmem>>, %arg5: memref<8x128xf32, #tpu.memory_space<vmem>>) attributes {dimension_semantics = [#tpu.dimension_semantics<parallel>], iteration_bounds = array<i64: 1>, scalar_prefetch = 0 : i64, scratch_operands = 0 : i64, tpu.core_type = #tpu.core_type<tc>, window_params = [{transform_indices = @transform_0, window_bounds = array<i64: 8, 128>}, {transform_indices = @transform_1, window_bounds = array<i64: 8, 128>}, {transform_indices = @transform_2, window_bounds = array<i64: 8, 128>}, {transform_indices = @transform_3, window_bounds = array<i64: 8, 128>}, {transform_indices = @transform_4, window_bounds = array<i64: 8, 128>}]} {
    %c0 = arith.constant 0 : index
    %c0_0 = arith.constant 0 : index
    %0 = vector.load %arg1[%c0, %c0_0] : memref<8x128xf32, #tpu.memory_space<vmem>>, vector<8x128xf32>
    %c0_1 = arith.constant 0 : index
    %c0_2 = arith.constant 0 : index
    %1 = vector.load %arg2[%c0_1, %c0_2] : memref<8x128xf32, #tpu.memory_space<vmem>>, vector<8x128xf32>
    %c0_3 = arith.constant 0 : index
    %c0_4 = arith.constant 0 : index
    %2 = vector.load %arg3[%c0_3, %c0_4] : memref<8x128xf32, #tpu.memory_space<vmem>>, vector<8x128xf32>
    %c0_5 = arith.constant 0 : index
    %c0_6 = arith.constant 0 : index
    %3 = vector.load %arg4[%c0_5, %c0_6] : memref<8x128xf32, #tpu.memory_space<vmem>>, vector<8x128xf32>
    %4 = arith.subf %0, %2 : vector<8x128xf32>
    %5 = arith.subf %1, %3 : vector<8x128xf32>
    %6 = arith.addf %0, %2 : vector<8x128xf32>
    %7 = math.cos %4 : vector<8x128xf32>
    %8 = math.cos %5 : vector<8x128xf32>
    %9 = math.cos %6 : vector<8x128xf32>
    %cst = arith.constant 1.000000e+00 : f32
    %10 = vector.broadcast %cst : f32 to vector<8x128xf32>
    %11 = arith.subf %10, %7 : vector<8x128xf32>
    %cst_7 = arith.constant 5.000000e-01 : f32
    %12 = vector.broadcast %cst_7 : f32 to vector<8x128xf32>
    %13 = arith.mulf %12, %11 : vector<8x128xf32>
    %14 = arith.addf %7, %9 : vector<8x128xf32>
    %cst_8 = arith.constant 5.000000e-01 : f32
    %15 = vector.broadcast %cst_8 : f32 to vector<8x128xf32>
    %16 = arith.mulf %15, %14 : vector<8x128xf32>
    %cst_9 = arith.constant 1.000000e+00 : f32
    %17 = vector.broadcast %cst_9 : f32 to vector<8x128xf32>
    %18 = arith.subf %17, %8 : vector<8x128xf32>
    %cst_10 = arith.constant 5.000000e-01 : f32
    %19 = vector.broadcast %cst_10 : f32 to vector<8x128xf32>
    %20 = arith.mulf %19, %18 : vector<8x128xf32>
    %21 = arith.mulf %16, %20 : vector<8x128xf32>
    %22 = arith.addf %13, %21 : vector<8x128xf32>
    %cst_11 = arith.constant 0.000000e+00 : f32
    %cst_12 = arith.constant 1.000000e+00 : f32
    %23 = vector.broadcast %cst_11 : f32 to vector<8x128xf32>
    %24 = arith.maximumf %23, %22 : vector<8x128xf32>
    %25 = vector.broadcast %cst_12 : f32 to vector<8x128xf32>
    %26 = arith.minimumf %25, %24 : vector<8x128xf32>
    %27 = math.sqrt %26 : vector<8x128xf32>
    %cst_13 = arith.constant 1.000000e+00 : f32
    %28 = vector.broadcast %cst_13 : f32 to vector<8x128xf32>
    %29 = arith.subf %28, %26 : vector<8x128xf32>
    %30 = math.sqrt %29 : vector<8x128xf32>
    %31 = math.atan2 %27, %30 : vector<8x128xf32>
    %c0_14 = arith.constant 0 : index
    %c0_15 = arith.constant 0 : index
    %32 = vector.load %arg5[%c0_14, %c0_15] : memref<8x128xf32, #tpu.memory_space<vmem>>, vector<8x128xf32>
    tpu.vector_store %arg5[%c0_14, %c0_15], %31 {strides = array<i32>} : memref<8x128xf32, #tpu.memory_space<vmem>>, vector<8x128xf32>,
    return
  }
  func.func @transform_0(%arg0: i32) -> (i32, i32) {
    %c0_i32 = arith.constant 0 : i32
    %c0_i32_0 = arith.constant 0 : i32
    return %arg0, %c0_i32 : i32, i32
  }
  func.func @transform_1(%arg0: i32) -> (i32, i32) {
    %c0_i32 = arith.constant 0 : i32
    %c0_i32_0 = arith.constant 0 : i32
    return %arg0, %c0_i32 : i32, i32
  }
  func.func @transform_2(%arg0: i32) -> (i32, i32) {
    %c0_i32 = arith.constant 0 : i32
    %c0_i32_0 = arith.constant 0 : i32
    return %arg0, %c0_i32 : i32, i32
  }
  func.func @transform_3(%arg0: i32) -> (i32, i32) {
    %c0_i32 = arith.constant 0 : i32
    %c0_i32_0 = arith.constant 0 : i32
    return %arg0, %c0_i32 : i32, i32
  }
  func.func @transform_4(%arg0: i32) -> (i32, i32) {
    %c0_i32 = arith.constant 0 : i32
    %c0_i32_0 = arith.constant 0 : i32
    return %arg0, %c0_i32 : i32, i32
  }
}

</mosaic_0001>

<llo_original>
// kernel: haversine_loss.1
$region0: #{haversine_loss.1}
  #allocation0 [shape = 'u32[]', space=smem, size = 0x4, offset = 0x4, fixed_abs, tag = 'smem constant byte address 0x4 - core index']
  #allocation1 [shape = 'u32[144,128]{1,0:T(1,128)}', space=vmem, size = 0x12000, scoped, tag = 'internal scratch']
  %s0 = inlined_call_operand.vmem [shape: f32[8,128], index: 0, kind: input, shape index: {}]
  %s1 = inlined_call_operand.vmem [shape: f32[8,128], index: 1, kind: input, shape index: {}]
  %s2 = inlined_call_operand.vmem [shape: f32[8,128], index: 2, kind: input, shape index: {}]
  %s3 = inlined_call_operand.vmem [shape: f32[8,128], index: 3, kind: input, shape index: {}]
  %s4 = inlined_call_operand.vmem [shape: f32[8,128], index: 4, kind: output, shape index: {}]
  %s5 = sld [smem:[#allocation0]]
  $region26: #{haversine_loss.1} parent=0
    _
  %s7 = ssub.s32 1, %s5
  %s8 = scalar_select 0, %s7, %s5
  // Predicated region
  $region2: #{haversine_loss.1} parent=0 // pred_check
    _
  $region3: #{haversine_loss.1} parent=0 // pred_check_branch
    %10 = sbr.rel (0) target = $region5
  $region4: #{haversine_loss.1} parent=0 // pred_region
    _
  $region5: #{haversine_loss.1} parent=0 // pred_fallthru
    _
  // Predicated region
  $region6: #{haversine_loss.1} parent=0 // pred_check
    _
  $region7: #{haversine_loss.1} parent=0 // pred_check_branch
    %12 = sbr.rel (0) target = $region9
  $region8: #{haversine_loss.1} parent=0 // pred_region
    _
  $region9: #{haversine_loss.1} parent=0 // pred_fallthru
    _
  // Predicated region
  $region10: #{haversine_loss.1} parent=0 // pred_check
    _
  $region11: #{haversine_loss.1} parent=0 // pred_check_branch
    %14 = sbr.rel (0) target = $region13
  $region12: #{haversine_loss.1} parent=0 // pred_region
    _
  $region13: #{haversine_loss.1} parent=0 // pred_fallthru
    _
  // Predicated region
  $region14: #{haversine_loss.1} parent=0 // pred_check
    _
  $region15: #{haversine_loss.1} parent=0 // pred_check_branch
    %16 = sbr.rel (0) target = $region17
  $region16: #{haversine_loss.1} parent=0 // pred_region
    _
  $region17: #{haversine_loss.1} parent=0 // pred_fallthru
    _
  %v17 = vld [vmem:[%s0] sm:$0xff]
  %v18 = vld [vmem:[%s1] sm:$0xff]
  %v19 = vld [vmem:[%s2] sm:$0xff]
  %v20 = vld [vmem:[%s3] sm:$0xff]
  %v21 = vsub.f32 %v17, %v19
  %v22 = vsub.f32 %v18, %v20
  %v23 = vadd.f32 %v17, %v19
  %v24 = vand.u32 2147483647, %v21
  %vm25 = vcmp.le.f32.partialorder %v24, 0.7853982
  %vm26 = vcmp.lt.s32.totalorder %v21, 0
  %v27 = vand.u32 %v21, 2139095040
  %v28 = vshrl.u32 %v27, 23
  %v29 = vsub.s32 %v28, 127
  %v30 = vand.u32 2147483647, %v21
  %v31 = vand.u32 %v30, 8388607
  %v32 = vor.u32 %v31, 8388608
  %v33 = vsub.s32 0, %v32
  %v34 = vadd.s32 %v29, 1
  %vm35 = vcmp.gt.s32.totalorder %v34, 0
  %v36 = vsel %vm35, %v34, 0
  %v37 = vshrl.u32 %v36, 5
  %v38 = vand.u32 %v36, 31
  %v39 = vsub.s32 32, %v38
  %v40 = vshrl.u32 683565275, %v39
  %v41 = vshll.u32 683565275, %v38
  %v42 = vshrl.u32 2475754826, %v39
  %v43 = vor.u32 %v41, %v42
  %v44 = vshll.u32 2475754826, %v38
  %v45 = vshrl.u32 2131351028, %v39
  %v46 = vor.u32 %v44, %v45
  %v47 = vshll.u32 2131351028, %v38
  %v48 = vshrl.u32 2102212464, %v39
  %v49 = vor.u32 %v47, %v48
  %v50 = vshll.u32 2102212464, %v38
  %v51 = vshrl.u32 920167782, %v39
  %v52 = vor.u32 %v50, %v51
  %v53 = vshll.u32 920167782, %v38
  %v54 = vshrl.u32 1326507024, %v39
  %v55 = vor.u32 %v53, %v54
  %vm56 = vcmp.lt.s32.totalorder %v37, 1
  %vm57 = vcmp.lt.s32.totalorder %v37, 2
  %vm58 = vcmp.lt.s32.totalorder %v37, 3
  %vm59 = vcmp.lt.s32.totalorder %v37, 4
  %v60 = vsel %vm56, %v40, %v43
  %v61 = vsel %vm59, %v49, 2102212464
  %v62 = vsel %vm58, %v46, %v61
  %v63 = vsel %vm57, %v60, %v62
  %v64 = vsel %vm56, %v43, %v46
  %v65 = vsel %vm59, %v52, 920167782
  %v66 = vsel %vm58, %v49, %v65
  %v67 = vsel %vm57, %v64, %v66
  %v68 = vsel %vm56, %v46, %v49
  %v69 = vsel %vm59, %v55, 1326507024
  %v70 = vsel %vm58, %v52, %v69
  %v71 = vsel %vm57, %v68, %v70
  %v72 = vshll.u32 %v32, 8
  %v73 = vmul.u32.u64.compose %v72, %v71
  %v74 = vextract.low.u32 %v73
  %v75 = vextract.high.u32 %v73
  %v76 = vmul.u32.u64.compose %v72, %v67
  %v77 = vextract.low.u32 %v76
  %v78 = vextract.high.u32 %v76
  %v79 = vmul.u32 %v72, %v63
  %v80 = vadd.s32 %v75, %v77
  %vm81 = vc.u32 %v75, %v77
  %v82 = vadd.s32 %v78, 1
  %v83 = vsel %vm81, %v82, %v78
  %v84 = vadd.s32 %v79, %v83
  %v85 = vadd.s32 %v84, 536870912
  %v86 = vshrl.u32 %v85, 30
  %v87 = vshll.u32 %v86, 30
  %v88 = vsub.s32 %v84, %v87
  %vm89 = vcmp.lt.s32.totalorder %v88, 0
  %v90 = vsub.s32 0, %v88
  %v91 = vsel %vm89, %v90, %v88
  %v92 = vclz %v91
  %v93 = vsub.s32 %v92, 2
  %vm94 = vcmp.gt.s32.totalorder 0, %v93
  %v95 = vsel %vm94, 0, %v93
  %v96 = vsub.s32 32, %v95
  %v97 = vshll.u32 %v88, %v95
  %v98 = vshrl.u32 %v80, %v96
  %v99 = vor.u32 %v97, %v98
  %v100 = vsub.s32 4294967266, %v95
  %v101 = vadd.s32 %v100, 127
  %v102 = vshll.u32 %v101, 23
  %v103 = vor.u32 4788187, %v102
  %v104 = vand.u32 2147483647, %v103
  %v106 = vcvt.s32.f32 %v99
  %v107 = vmul.f32 %v106, %v104
  %v108 = vxor.u32 %v107, 2147483648
  %v109 = vsel %vm26, %v108, %v107
  %v110 = vsub.s32 4, %v86
  %v111 = vsel %vm26, %v110, %v86
  %v112 = vsel %vm25, %v21, %v109
  %v113 = vsel %vm25, 0, %v111
  %v114 = vcosq.f32.pop %v112
  %v115 = vsinq.f32.pop %v112
  %vm116 = vweird.f32 %v21
  %v117 = vand.u32 %v113, 3
  %vm118 = vcmp.lt.s32.totalorder %v117, 2
  %vm119 = vcmp.eq.s32.totalorder %v117, 0
  %v120 = vxor.u32 %v115, 2147483648
  %v121 = vsel %vm119, %v114, %v120
  %vm122 = vcmp.eq.s32.totalorder %v117, 2
  %v123 = vxor.u32 %v114, 2147483648
  %v124 = vsel %vm122, %v123, %v115
  %v125 = vsel %vm118, %v121, %v124
  %v126 = vsel %vm116, nan, %v125
  %v127 = vand.u32 2147483647, %v22
  %vm128 = vcmp.le.f32.partialorder %v127, 0.7853982
  %vm129 = vcmp.lt.s32.totalorder %v22, 0
  %v130 = vand.u32 %v22, 2139095040
  %v131 = vshrl.u32 %v130, 23
  %v132 = vsub.s32 %v131, 127
  %v133 = vand.u32 2147483647, %v22
  %v134 = vand.u32 %v133, 8388607
  %v135 = vor.u32 %v134, 8388608
  %v136 = vsub.s32 0, %v135
  %v137 = vadd.s32 %v132, 1
  %vm138 = vcmp.gt.s32.totalorder %v137, 0
  %v139 = vsel %vm138, %v137, 0
  %v140 = vshrl.u32 %v139, 5
  %v141 = vand.u32 %v139, 31
  %v142 = vsub.s32 32, %v141
  %v143 = vshrl.u32 683565275, %v142
  %v144 = vshll.u32 683565275, %v141
  %v145 = vshrl.u32 2475754826, %v142
  %v146 = vor.u32 %v144, %v145
  %v147 = vshll.u32 2475754826, %v141
  %v148 = vshrl.u32 2131351028, %v142
  %v149 = vor.u32 %v147, %v148
  %v150 = vshll.u32 2131351028, %v141
  %v151 = vshrl.u32 2102212464, %v142
  %v152 = vor.u32 %v150, %v151
  %v153 = vshll.u32 2102212464, %v141
  %v154 = vshrl.u32 920167782, %v142
  %v155 = vor.u32 %v153, %v154
  %v156 = vshll.u32 920167782, %v141
  %v157 = vshrl.u32 1326507024, %v142
  %v158 = vor.u32 %v156, %v157
  %vm159 = vcmp.lt.s32.totalorder %v140, 1
  %vm160 = vcmp.lt.s32.totalorder %v140, 2
  %vm161 = vcmp.lt.s32.totalorder %v140, 3
  %vm162 = vcmp.lt.s32.totalorder %v140, 4
  %v163 = vsel %vm159, %v143, %v146
  %v164 = vsel %vm162, %v152, 2102212464
  %v165 = vsel %vm161, %v149, %v164
  %v166 = vsel %vm160, %v163, %v165
  %v167 = vsel %vm159, %v146, %v149
  %v168 = vsel %vm162, %v155, 920167782
  %v169 = vsel %vm161, %v152, %v168
  %v170 = vsel %vm160, %v167, %v169
  %v171 = vsel %vm159, %v149, %v152
  %v172 = vsel %vm162, %v158, 1326507024
  %v173 = vsel %vm161, %v155, %v172
  %v174 = vsel %vm160, %v171, %v173
  %v175 = vshll.u32 %v135, 8
  %v176 = vmul.u32.u64.compose %v175, %v174
  %v177 = vextract.low.u32 %v176
  %v178 = vextract.high.u32 %v176
  %v179 = vmul.u32.u64.compose %v175, %v170
  %v180 = vextract.low.u32 %v179
  %v181 = vextract.high.u32 %v179
  %v182 = vmul.u32 %v175, %v166
  %v183 = vadd.s32 %v178, %v180
  %vm184 = vc.u32 %v178, %v180
  %v185 = vadd.s32 %v181, 1
  %v186 = vsel %vm184, %v185, %v181
  %v187 = vadd.s32 %v182, %v186
  %v188 = vadd.s32 %v187, 536870912
  %v189 = vshrl.u32 %v188, 30
  %v190 = vshll.u32 %v189, 30
  %v191 = vsub.s32 %v187, %v190
  %vm192 = vcmp.lt.s32.totalorder %v191, 0
  %v193 = vsub.s32 0, %v191
  %v194 = vsel %vm192, %v193, %v191
  %v195 = vclz %v194
  %v196 = vsub.s32 %v195, 2
  %vm197 = vcmp.gt.s32.totalorder 0, %v196
  %v198 = vsel %vm197, 0, %v196
  %v199 = vsub.s32 32, %v198
  %v200 = vshll.u32 %v191, %v198
  %v201 = vshrl.u32 %v183, %v199
  %v202 = vor.u32 %v200, %v201
  %v203 = vsub.s32 4294967266, %v198
  %v204 = vadd.s32 %v203, 127
  %v205 = vshll.u32 %v204, 23
  %v206 = vor.u32 4788187, %v205
  %v207 = vand.u32 2147483647, %v206
  %v209 = vcvt.s32.f32 %v202
  %v210 = vmul.f32 %v209, %v207
  %v211 = vxor.u32 %v210, 2147483648
  %v212 = vsel %vm129, %v211, %v210
  %v213 = vsub.s32 4, %v189
  %v214 = vsel %vm129, %v213, %v189
  %v215 = vsel %vm128, %v22, %v212
  %v216 = vsel %vm128, 0, %v214
  %v217 = vcosq.f32.pop %v215
  %v218 = vsinq.f32.pop %v215
  %vm219 = vweird.f32 %v22
  %v220 = vand.u32 %v216, 3
  %vm221 = vcmp.lt.s32.totalorder %v220, 2
  %vm222 = vcmp.eq.s32.totalorder %v220, 0
  %v223 = vxor.u32 %v218, 2147483648
  %v224 = vsel %vm222, %v217, %v223
  %vm225 = vcmp.eq.s32.totalorder %v220, 2
  %v226 = vxor.u32 %v217, 2147483648
  %v227 = vsel %vm225, %v226, %v218
  %v228 = vsel %vm221, %v224, %v227
  %v229 = vsel %vm219, nan, %v228
  %v230 = vand.u32 2147483647, %v23
  %vm231 = vcmp.le.f32.partialorder %v230, 0.7853982
  %vm232 = vcmp.lt.s32.totalorder %v23, 0
  %v233 = vand.u32 %v23, 2139095040
  %v234 = vshrl.u32 %v233, 23
  %v235 = vsub.s32 %v234, 127
  %v236 = vand.u32 2147483647, %v23
  %v237 = vand.u32 %v236, 8388607
  %v238 = vor.u32 %v237, 8388608
  %v239 = vsub.s32 0, %v238
  %v240 = vadd.s32 %v235, 1
  %vm241 = vcmp.gt.s32.totalorder %v240, 0
  %v242 = vsel %vm241, %v240, 0
  %v243 = vshrl.u32 %v242, 5
  %v244 = vand.u32 %v242, 31
  %v245 = vsub.s32 32, %v244
  %v246 = vshrl.u32 683565275, %v245
  %v247 = vshll.u32 683565275, %v244
  %v248 = vshrl.u32 2475754826, %v245
  %v249 = vor.u32 %v247, %v248
  %v250 = vshll.u32 2475754826, %v244
  %v251 = vshrl.u32 2131351028, %v245
  %v252 = vor.u32 %v250, %v251
  %v253 = vshll.u32 2131351028, %v244
  %v254 = vshrl.u32 2102212464, %v245
  %v255 = vor.u32 %v253, %v254
  %v256 = vshll.u32 2102212464, %v244
  %v257 = vshrl.u32 920167782, %v245
  %v258 = vor.u32 %v256, %v257
  %v259 = vshll.u32 920167782, %v244
  %v260 = vshrl.u32 1326507024, %v245
  %v261 = vor.u32 %v259, %v260
  %vm262 = vcmp.lt.s32.totalorder %v243, 1
  %vm263 = vcmp.lt.s32.totalorder %v243, 2
  %vm264 = vcmp.lt.s32.totalorder %v243, 3
  %vm265 = vcmp.lt.s32.totalorder %v243, 4
  %v266 = vsel %vm262, %v246, %v249
  %v267 = vsel %vm265, %v255, 2102212464
  %v268 = vsel %vm264, %v252, %v267
  %v269 = vsel %vm263, %v266, %v268
  %v270 = vsel %vm262, %v249, %v252
  %v271 = vsel %vm265, %v258, 920167782
  %v272 = vsel %vm264, %v255, %v271
  %v273 = vsel %vm263, %v270, %v272
  %v274 = vsel %vm262, %v252, %v255
  %v275 = vsel %vm265, %v261, 1326507024
  %v276 = vsel %vm264, %v258, %v275
  %v277 = vsel %vm263, %v274, %v276
  %v278 = vshll.u32 %v238, 8
  %v279 = vmul.u32.u64.compose %v278, %v277
  %v280 = vextract.low.u32 %v279
  %v281 = vextract.high.u32 %v279
  %v282 = vmul.u32.u64.compose %v278, %v273
  %v283 = vextract.low.u32 %v282
  %v284 = vextract.high.u32 %v282
  %v285 = vmul.u32 %v278, %v269
  %v286 = vadd.s32 %v281, %v283
  %vm287 = vc.u32 %v281, %v283
  %v288 = vadd.s32 %v284, 1
  %v289 = vsel %vm287, %v288, %v284
  %v290 = vadd.s32 %v285, %v289
  %v291 = vadd.s32 %v290, 536870912
  %v292 = vshrl.u32 %v291, 30
  %v293 = vshll.u32 %v292, 30
  %v294 = vsub.s32 %v290, %v293
  %vm295 = vcmp.lt.s32.totalorder %v294, 0
  %v296 = vsub.s32 0, %v294
  %v297 = vsel %vm295, %v296, %v294
  %v298 = vclz %v297
  %v299 = vsub.s32 %v298, 2
  %vm300 = vcmp.gt.s32.totalorder 0, %v299
  %v301 = vsel %vm300, 0, %v299
  %v302 = vsub.s32 32, %v301
  %v303 = vshll.u32 %v294, %v301
  %v304 = vshrl.u32 %v286, %v302
  %v305 = vor.u32 %v303, %v304
  %v306 = vsub.s32 4294967266, %v301
  %v307 = vadd.s32 %v306, 127
  %v308 = vshll.u32 %v307, 23
  %v309 = vor.u32 4788187, %v308
  %v310 = vand.u32 2147483647, %v309
  %v312 = vcvt.s32.f32 %v305
  %v313 = vmul.f32 %v312, %v310
  %v314 = vxor.u32 %v313, 2147483648
  %v315 = vsel %vm232, %v314, %v313
  %v316 = vsub.s32 4, %v292
  %v317 = vsel %vm232, %v316, %v292
  %v318 = vsel %vm231, %v23, %v315
  %v319 = vsel %vm231, 0, %v317
  %v320 = vcosq.f32.pop %v318
  %v321 = vsinq.f32.pop %v318
  %vm322 = vweird.f32 %v23
  %v323 = vand.u32 %v319, 3
  %vm324 = vcmp.lt.s32.totalorder %v323, 2
  %vm325 = vcmp.eq.s32.totalorder %v323, 0
  %v326 = vxor.u32 %v321, 2147483648
  %v327 = vsel %vm325, %v320, %v326
  %vm328 = vcmp.eq.s32.totalorder %v323, 2
  %v329 = vxor.u32 %v320, 2147483648
  %v330 = vsel %vm328, %v329, %v321
  %v331 = vsel %vm324, %v327, %v330
  %v332 = vsel %vm322, nan, %v331
  %v333 = vsub.f32 1.0, %v126
  %v334 = vmul.f32 %v333, 0.5
  %v335 = vadd.f32 %v126, %v332
  %v336 = vmul.f32 %v335, 0.5
  %v337 = vsub.f32 1.0, %v229
  %v338 = vmul.f32 %v337, 0.5
  %v339 = vmul.f32 %v336, %v338
  %v340 = vadd.f32 %v334, %v339
  %v341 = vmax.f32 %v340, 0.0
  %v342 = vmin.f32 %v341, 1.0
  %v343 = vrsqrt.pop %v342
  %v344 = vmul.f32 %v342, %v343
  %vm345 = vcmp.eq.f32.partialorder %v342, inf
  %v346 = vsel %vm345, %v342, %v344
  %vm347 = vcmp.eq.f32.partialorder %v342, 0.0
  %v348 = vand.u32 %v342, 2147483648
  %v349 = vsel %vm347, %v348, %v346
  %v350 = vsub.f32 1.0, %v342
  %v351 = vrsqrt.pop %v350
  %v352 = vmul.f32 %v350, %v351
  %vm353 = vcmp.eq.f32.partialorder %v350, inf
  %v354 = vsel %vm353, %v350, %v352
  %vm355 = vcmp.eq.f32.partialorder %v350, 0.0
  %v356 = vand.u32 %v350, 2147483648
  %v357 = vsel %vm355, %v356, %v354
  %v358 = vand.u32 2147483647, %v357
  %v359 = vand.u32 2147483647, %v349
  %v360 = vmin.f32 %v358, %v359
  %v361 = vmax.f32 %v358, %v359
  %v362 = vrcp.pop %v361
  %v363 = vmul.f32 %v360, %v362
  %v364 = vmul.f32 %v363, %v363
  %v365 = vmul.f32 0.002785687, %v364
  %v366 = vadd.f32 %v365, -0.015866
  %v367 = vmul.f32 %v366, %v364
  %v368 = vadd.f32 %v367, 0.04247222
  %v369 = vmul.f32 %v368, %v364
  %v370 = vadd.f32 %v369, -0.074975304
  %v371 = vmul.f32 %v370, %v364
  %v372 = vadd.f32 %v371, 0.1064488
  %v373 = vmul.f32 %v372, %v364
  %v374 = vadd.f32 %v373, -0.14207031
  %v375 = vmul.f32 %v374, %v364
  %v376 = vadd.f32 %v375, 0.19993454
  %v377 = vmul.f32 %v376, %v364
  %v378 = vadd.f32 %v377, -0.33333147
  %v379 = vmul.f32 %v378, %v364
  %v380 = vmul.f32 %v379, %v363
  %v381 = vadd.f32 %v380, %v363
  %vm382 = vcmp.gt.f32.partialorder %v359, %v358
  %v383 = vsub.f32 1.5707964, %v381
  %v384 = vsel %vm382, %v383, %v381
  %vm385 = vcmp.lt.f32.partialorder %v357, 0.0
  %v386 = vsub.f32 3.1415927, %v384
  %v387 = vsel %vm385, %v386, %v384
  %vm388 = vcmp.lt.s32.totalorder %v357, 0
  %v389 = vsel %vm388, 3.1415927, 0.0
  %vm390 = vcmp.eq.f32.partialorder %v349, 0.0
  %v391 = vsel %vm390, %v389, %v387
  %vm392 = vcmp.ne.f32.partialorder %v357, %v357
  %vm393 = vcmp.ne.f32.partialorder %v349, %v349
  %vm394 = vmor %vm392, %vm393
  %v395 = vsel %vm394, nan, %v391
  %vm396 = vcmp.lt.f32.partialorder %v357, 0.0
  %v397 = vsel %vm396, 2.3561945, 0.7853982
  %vm398 = vcmp.eq.s32.totalorder %v358, inf
  %vm399 = vcmp.eq.s32.totalorder %v359, inf
  %vm400 = vmand %vm398, %vm399
  %v401 = vsel %vm400, %v397, %v395
  %v402 = vand.u32 2147483647, %v401
  %v403 = vand.u32 %v349, 2147483648
  %v404 = vor.u32 %v402, %v403
  %405 = vst [vmem:[%s4] sm:$0xff] %v404
  // Predicated region
  $region18: #{haversine_loss.1} parent=0 // pred_check
    _
  $region19: #{haversine_loss.1} parent=0 // pred_check_branch
    %407 = sbr.rel (0) target = $region21
  $region20: #{haversine_loss.1} parent=0 // pred_region
    _
  $region21: #{haversine_loss.1} parent=0 // pred_fallthru
    _
  // Predicated region
  $region22: #{haversine_loss.1} parent=0 // pred_check
    _
  $region23: #{haversine_loss.1} parent=0 // pred_check_branch
    %409 = sbr.rel (0) target = $region25
  $region24: #{haversine_loss.1} parent=0 // pred_region
    _
  $region25: #{haversine_loss.1} parent=0 // pred_fallthru
    _

</llo_original>
